<compile_context>
chip_gen: v7x
topology: tpu7x:2x2x1
jax: 0.10.0
libtpu: 0.0.40
codegen_flags: <defaults>
</compile_context>

<pallas_src>
import functools

import numpy as np
import jax
import jax.numpy as jnp
from jax.experimental import pallas as pl
from jax.experimental.pallas import tpu as pltpu


HEAD_W = 16     # lane width of the fused head output: [templates | seg | box | pad]
BIAS_W = 32     # bias slab lane width (>= C2 and >= HEAD_W)
K_PAD = 32      # im2col K (3*3*3=27) padded to 32, col 27 = 1.0 (bias column)


# ----------------------------- Pallas kernel -------------------------------

def _fused_dtoid_kernel(x_ref, w1_ref, w2_ref, wh_ref, bias_ref, o_ref):
    """Fused backbone + heads on one row tile (raw logits out).

    x_ref:   [tm, K_PAD]    bf16 im2col patches (raw pixels, bias column folded in)
    w1_ref:  [K_PAD, C1]    bf16 conv1 weights (preprocess folded, +bias row)
    w2_ref:  [C1, C2]       bf16 conv2 (1x1) weights
    wh_ref:  [C2, HEAD_W]   bf16 fused head weights [templates | seg | box | pad]
    bias_ref:[8, BIAS_W]    f32  row0 = conv2 bias, row1 = head bias
    o_ref:   [tm, HEAD_W]   f32  fused head logits
    """
    # conv1 (3x3 s2 as im2col matmul, bias via folded ones-column), ReLU
    f1 = jnp.dot(x_ref[...], w1_ref[...], preferred_element_type=jnp.float32)
    f1 = jnp.maximum(f1, 0.0)

    b = bias_ref[...]

    # conv2 (1x1) + bias, ReLU  (feature tile never leaves VMEM)
    f2 = jnp.dot(f1.astype(w2_ref.dtype), w2_ref[...],
                 preferred_element_type=jnp.float32)
    f2 = jnp.maximum(f2 + b[0:1, :f2.shape[1]], 0.0)

    # fused heads: one narrow matmul for scores/seg/box; store raw logits
    h = jnp.dot(f2.astype(wh_ref.dtype), wh_ref[...],
                preferred_element_type=jnp.float32)
    o_ref[...] = (h + b[1:2, :h.shape[1]]).astype(o_ref.dtype)


def dtoid_fused(patches, w1, w2, wh, biases, *, tm):
    """patches: [Pp, K_PAD] bf16 (Pp % tm == 0) -> fused head logits [Pp, HEAD_W] f32."""
    Pp, K = patches.shape
    C1 = w1.shape[1]
    C2 = w2.shape[1]
    BW = biases.shape[1]
    assert Pp % tm == 0
    grid = (Pp // tm,)

    flops = 2 * Pp * (K * C1 + C1 * C2 + C2 * HEAD_W)
    bytes_accessed = (Pp * K * 2 + Pp * HEAD_W * 4
                      + (K * C1 + C1 * C2 + C2 * HEAD_W) * 2 + 8 * BW * 4)

    return pl.pallas_call(
        _fused_dtoid_kernel,
        out_shape=jax.ShapeDtypeStruct((Pp, HEAD_W), jnp.float32),
        grid_spec=pltpu.PrefetchScalarGridSpec(
            num_scalar_prefetch=0,
            grid=grid,
            in_specs=[
                pl.BlockSpec((tm, K), lambda i: (i, 0)),          # patches row tile
                pl.BlockSpec((K, C1), lambda i: (0, 0)),          # conv1 W (resident)
                pl.BlockSpec((C1, C2), lambda i: (0, 0)),         # conv2 W (resident)
                pl.BlockSpec((C2, HEAD_W), lambda i: (0, 0)),     # fused head W
                pl.BlockSpec((8, BW), lambda i: (0, 0)),          # bias slab
            ],
            out_specs=pl.BlockSpec((tm, HEAD_W), lambda i: (i, 0)),
        ),
        compiler_params=pltpu.CompilerParams(
            dimension_semantics=("parallel",),
            vmem_limit_bytes=32 * 1024 * 1024,   # safe on v5e/v6e/v7x
        ),
        cost_estimate=pl.CostEstimate(flops=flops, transcendentals=0,
                                      bytes_accessed=bytes_accessed),
    )(patches, w1, w2, wh, biases)


# ------------------------------- JAX glue -----------------------------------

def im2col_padded(x, kh, kw, stride, k_pad, pad_value):
    """x: [H, W, C] raw-valued image -> [Ho*Wo, k_pad] (SAME padding).

    pad_value is the per-channel raw pixel value that normalizes to 0 after the
    preprocess fold (255*mean), so the border matches zero padding of the
    normalized image. Columns [0:kh*kw*C] are the patch, column kh*kw*C is 1.0
    (bias column), remainder is zero padding up to k_pad.
    Note: matches conv(pad=1, stride=2) only for even H, W (Ho = H // stride).
    """
    H, W, C = x.shape
    pad = kh // 2
    xp = jnp.broadcast_to(pad_value.astype(x.dtype), (H + 2 * pad, W + 2 * pad, C))
    xp = xp.at[pad:pad + H, pad:pad + W, :].set(x)
    Ho, Wo = H // stride, W // stride
    cols = []
    for i in range(kh):
        for j in range(kw):
            cols.append(xp[i:i + Ho * stride:stride, j:j + Wo * stride:stride, :])
    K = kh * kw * C
    patches = jnp.concatenate(cols, axis=-1).reshape(Ho * Wo, K)
    ones = jnp.ones((Ho * Wo, 1), patches.dtype)
    zeros = jnp.zeros((Ho * Wo, k_pad - K - 1), patches.dtype)
    return jnp.concatenate([patches, ones, zeros], axis=-1)


def make_params(key, *, cin=3, c1=32, c2=32, n_templates=8):
    ks = jax.random.split(key, 10)
    sc = 0.1
    params = {
        "w_conv1": sc * jax.random.normal(ks[0], (3 * 3 * cin, c1), jnp.float32),
        "b_conv1": sc * jax.random.normal(ks[1], (c1,), jnp.float32),
        "w_conv2": sc * jax.random.normal(ks[2], (c1, c2), jnp.float32),
        "b_conv2": sc * jax.random.normal(ks[3], (c2,), jnp.float32),
        "w_seg":   sc * jax.random.normal(ks[4], (c2, 1), jnp.float32),
        "b_seg":   sc * jax.random.normal(ks[5], (1,), jnp.float32),
        "w_box":   sc * jax.random.normal(ks[6], (c2, 4), jnp.float32),
        "b_box":   sc * jax.random.normal(ks[7], (4,), jnp.float32),
        # synthetic template features (stand-ins for compute_template_local/global)
        "tmpl_local":  sc * jax.random.normal(ks[8], (n_templates, c2), jnp.float32),
        "tmpl_global": sc * jax.random.normal(ks[9], (n_templates, c2), jnp.float32),
    }
    # synthetic poses.txt z column (negative, as in the LINEMOD templates)
    pose_z_values = -(0.55 + 0.02 * np.arange(n_templates, dtype=np.float64))
    return params, pose_z_values


def pack_params(params, *, cin=3):
    """Fold preprocess + biases into lane-dense slabs, cast matmul operands to bf16."""
    c1 = params["w_conv1"].shape[1]
    c2 = params["w_conv2"].shape[1]
    T = params["tmpl_local"].shape[0]
    K = params["w_conv1"].shape[0]          # 27
    assert T + 5 <= HEAD_W and K + 1 <= K_PAD
    assert c2 <= BIAS_W and HEAD_W <= BIAS_W

    mean = jnp.array([0.485, 0.456, 0.406], jnp.float32)
    std = jnp.array([0.229, 0.224, 0.225], jnp.float32)

    # fold (x/255 - mean)/std into conv1: w1' = w1/(255*std_c); b1' absorbs -mean/std
    ch = jnp.arange(K) % cin                              # channel of each im2col row
    scale = (1.0 / (255.0 * std))[ch]                     # [K]
    shift = (mean / std)[ch]                              # [K]
    w1_eff = params["w_conv1"] * scale[:, None]
    b1_eff = params["b_conv1"] - jnp.sum(shift[:, None] * params["w_conv1"], axis=0)

    # conv1 slab: weights in rows [0:K], bias in row K (multiplied by ones column)
    w1 = jnp.zeros((K_PAD, c1), jnp.float32)
    w1 = w1.at[:K].set(w1_eff)
    w1 = w1.at[K].set(b1_eff)

    # fold template "global" feature into local embedding (FiLM-like), as before
    tmpl_emb = (params["tmpl_local"] * (1.0 + params["tmpl_global"])).T  # [C2, T]

    # fused head weights: [templates | seg | box | zero pad] -> HEAD_W lanes
    wh = jnp.zeros((c2, HEAD_W), jnp.float32)
    wh = wh.at[:, :T].set(tmpl_emb)
    wh = wh.at[:, T:T + 1].set(params["w_seg"])
    wh = wh.at[:, T + 1:T + 5].set(params["w_box"])

    # bias slab: row 0 = conv2 bias, row 1 = head bias (scores have no bias)
    biases = jnp.zeros((8, BIAS_W), jnp.float32)
    biases = biases.at[0, :c2].set(params["b_conv2"])
    biases = biases.at[1, T].set(params["b_seg"][0])
    biases = biases.at[1, T + 1:T + 5].set(params["b_box"])

    # raw pixel value whose normalized value is 0 (border padding equivalence)
    pad_value = (255.0 * mean).astype(jnp.bfloat16)

    return {
        "w1": w1.astype(jnp.bfloat16),
        "w2": params["w_conv2"].astype(jnp.bfloat16),
        "wh": wh.astype(jnp.bfloat16),
        "biases": biases,
        "pad_value": pad_value,
    }


def _is_multi_tensorcore():
    """v4 / v7x expose multiple TensorCores per JAX device; v5e / v6e are single-TC."""
    try:
        kind = jax.devices()[0].device_kind.lower()
    except Exception:
        return False
    return ("v7" in kind) or ("v4" in kind)


def _pick_tile(P, multi_tc):
    """Generation-aware row tile.

    Dual-TC chips: keep >=2 grid steps so both TensorCores get work (ceiling 4096).
    Single-TC chips: largest tile covering P in as few steps as possible (ceiling 2048).
    """
    if multi_tc:
        for tm in (4096, 2048, 1024, 512, 256, 128):
            if P >= 2 * tm:
                return tm
        return 128
    for tm in (2048, 1024, 512, 256, 128):
        if P >= tm:
            return tm
    return 128


@functools.partial(jax.jit, static_argnames=("stride", "topk", "n_templates", "tm"))
def dtoid_network_forward(img_u8, w1, w2, wh, biases, pad_value, *,
                          stride, topk, n_templates, tm):
    """img_u8: [H, W, 3] uint8 -> (top_k_scores, top_k_bboxes, top_k_ids, seg_pred)."""
    # preprocess (/255 + ImageNet mean/std) is folded into w1/b1; run im2col on
    # raw bf16 pixels (0..255 are exact in bf16).
    # TODO(synk): the original preprocess also resizes to a fixed network
    # resolution; here network size == input size.
    H, W, _ = img_u8.shape
    Ho, Wo = H // stride, W // stride
    P = Ho * Wo
    T = n_templates

    img = img_u8.astype(jnp.bfloat16)
    patches = im2col_padded(img, 3, 3, stride, K_PAD, pad_value)
    Pp = pl.cdiv(P, tm) * tm
    if Pp != P:
        patches = jnp.pad(patches, ((0, Pp - P), (0, 0)))

    heads = dtoid_fused(patches, w1, w2, wh, biases, tm=tm)[:P]   # [P, HEAD_W] logits

    score_logits = heads[:, :T]
    seg_logits = heads[:, T]
    box = heads[:, T + 1:T + 5]

    # top-k over (location, template) logits; sigmoid is monotone so selection
    # order is identical, and sigmoid is applied only to the k winners.
    flat = score_logits.reshape(-1)
    k = min(topk, flat.shape[0])
    top_vals, top_idx = jax.lax.top_k(flat, k)
    p_idx = top_idx // T
    t_idx = top_idx % T
    top_k_scores = jax.nn.sigmoid(top_vals)[:, None]              # [k, 1]

    # decode class-agnostic boxes only for the k selected locations
    box_k = box[p_idx]                                            # [k, 4]
    cx = ((p_idx % Wo).astype(jnp.float32) + 0.5) * stride
    cy = ((p_idx // Wo).astype(jnp.float32) + 0.5) * stride
    dx, dy, dw, dh = box_k[:, 0], box_k[:, 1], box_k[:, 2], box_k[:, 3]
    bw = 40.0 + 40.0 * jax.nn.sigmoid(dw)
    bh = 40.0 + 40.0 * jax.nn.sigmoid(dh)
    x1 = cx + dx - bw / 2.0
    y1 = cy + dy - bh / 2.0
    x2 = cx + dx + bw / 2.0
    y2 = cy + dy + bh / 2.0
    top_k_bboxes = jnp.stack([x1, y1, x2, y2], axis=1)            # [k, 4]

    top_k_template_ids = t_idx[:, None]                           # [k, 1]
    seg_pred = jax.nn.sigmoid(seg_logits).reshape(1, 1, Ho, Wo)   # [1, 1, Ho, Wo]
    return top_k_scores, top_k_bboxes, top_k_template_ids, seg_pred


class DTOIDWrapperPallas:
    """JAX/Pallas re-implementation of DTOIDWrapper.forward."""

    def __init__(self, no_filter_z=False, n_templates=8, stride=2, topk=500):
        self.no_filter_z = no_filter_z
        self.n_templates = n_templates
        self.stride = stride
        self.topk = topk
        self.multi_tc = _is_multi_tensorcore()
        params, pose_z = make_params(jax.random.PRNGKey(42), n_templates=n_templates)
        self.params = params
        self.packed = pack_params(params)
        # template_cache[obj_id] = (template_list, template_global_list, pose_z_values)
        self.template_cache = {
            "01": (params["tmpl_local"], params["tmpl_global"], pose_z)
        }

    def forward(self, img_numpy, obj_id):
        _, _, pose_z_values = self.template_cache[obj_id]
        img_h, img_w, img_c = img_numpy.shape
        network_h, network_w = img_h, img_w

        stride = self.stride
        P = (img_h // stride) * (img_w // stride)
        tm = _pick_tile(P, self.multi_tc)

        outs = dtoid_network_forward(
            jnp.asarray(img_numpy),
            self.packed["w1"], self.packed["w2"],
            self.packed["wh"], self.packed["biases"], self.packed["pad_value"],
            stride=stride, topk=self.topk, n_templates=self.n_templates, tm=tm)
        outs = jax.block_until_ready(outs)
        top_k_scores, top_k_bboxes, top_k_template_ids, seg_pred = outs

        pred_seg_np = np.asarray(seg_pred)
        pred_scores_np = np.asarray(top_k_scores)
        pred_bbox_np = np.asarray(top_k_bboxes)
        pred_template_ids = np.asarray(top_k_template_ids)[:, 0].astype(np.int64)
        template_z_values = pose_z_values[pred_template_ids]

        if not self.no_filter_z:
            pred_w_np = pred_bbox_np[:, 2] - pred_bbox_np[:, 0]
            pred_h_np = pred_bbox_np[:, 3] - pred_bbox_np[:, 1]
            pred_max_dim_np = np.stack([pred_w_np, pred_h_np]).transpose().max(axis=1)
            pred_z = 124 / pred_max_dim_np * -template_z_values
            pred_z_conds = (pred_z > 0.4) & (pred_z < 2)
            pred_z_conds_ids = np.where(pred_z_conds)[0]
            pred_scores_np = pred_scores_np[pred_z_conds_ids]
            pred_bbox_np = pred_bbox_np[pred_z_conds_ids]
            pred_template_ids = pred_template_ids[pred_z_conds_ids]
            pred_z = pred_z[pred_z_conds_ids]
        else:
            pred_z = np.zeros((pred_bbox_np.shape[0],), np.float64)

        pred_scores_np = pred_scores_np[:1]
        pred_bbox_np = pred_bbox_np[:1]
        pred_template_ids = pred_template_ids[:1]
        pred_z = pred_z[:1]
        pred_seg_np = pred_seg_np[:1]

        return {
            "pred_bbox_np": pred_bbox_np,
            "pred_scores_np": pred_scores_np,
            "pred_seg_np": pred_seg_np,
            "pred_template_ids": pred_template_ids,
            "network_w": network_w,
            "network_h": network_h,
            "img_h": img_h,
            "img_w": img_w,
        }


if __name__ == "__main__":
    key = jax.random.PRNGKey(0)
    # small deterministic "image": H=32, W=32, C=3 (uint8-like values)
    img_numpy = np.asarray(
        jax.random.uniform(key, (32, 32, 3), jnp.float32, 0.0, 255.0)
    ).astype(np.uint8)

    wrapper = DTOIDWrapperPallas(no_filter_z=False, n_templates=8)
    out = wrapper.forward(img_numpy, "01")

    assert out["pred_bbox_np"].shape[1] == 4
    assert out["pred_seg_np"].shape == (1, 1, 16, 16)
    assert out["network_h"] == 32 and out["network_w"] == 32
    print("KERNEL_OK")
</pallas_src>

<mosaic_0001>
module attributes {stable_mosaic.version = 11 : i64} {
  func.func @_fused_dtoid_kernel(%arg0: i32, %arg1: memref<256x32xbf16, #tpu.memory_space<vmem>>, %arg2: memref<32x32xbf16, #tpu.memory_space<vmem>>, %arg3: memref<32x32xbf16, #tpu.memory_space<vmem>>, %arg4: memref<32x16xbf16, #tpu.memory_space<vmem>>, %arg5: memref<8x32xf32, #tpu.memory_space<vmem>>, %arg6: memref<256x16xf32, #tpu.memory_space<vmem>>) attributes {dimension_semantics = [#tpu.dimension_semantics<parallel>], iteration_bounds = array<i64: 1>, scalar_prefetch = 0 : i64, scratch_operands = 0 : i64, tpu.core_type = #tpu.core_type<tc>, window_params = [{transform_indices = @transform_0, window_bounds = array<i64: 256, 32>}, {pipeline_mode = #tpu.pipeline_mode<synchronous>, transform_indices = @transform_1, window_bounds = array<i64: 32, 32>}, {pipeline_mode = #tpu.pipeline_mode<synchronous>, transform_indices = @transform_2, window_bounds = array<i64: 32, 32>}, {pipeline_mode = #tpu.pipeline_mode<synchronous>, transform_indices = @transform_3, window_bounds = array<i64: 32, 16>}, {pipeline_mode = #tpu.pipeline_mode<synchronous>, transform_indices = @transform_4, window_bounds = array<i64: 8, 32>}, {transform_indices = @transform_5, window_bounds = array<i64: 256, 16>}]} {
    %c0 = arith.constant 0 : index
    %c0_0 = arith.constant 0 : index
    %0 = vector.load %arg1[%c0, %c0_0] : memref<256x32xbf16, #tpu.memory_space<vmem>>, vector<256x32xbf16>
    %c0_1 = arith.constant 0 : index
    %c0_2 = arith.constant 0 : index
    %1 = vector.load %arg2[%c0_1, %c0_2] : memref<32x32xbf16, #tpu.memory_space<vmem>>, vector<32x32xbf16>
    %cst = arith.constant dense<0.000000e+00> : vector<256x32xf32>
    %2 = tpu.matmul %0, %1, %cst {dimension_numbers = #tpu.dot_dimension_numbers<[1], [0], [0], [1], [0, 0, 1, 1], [], []>} : vector<256x32xbf16>, vector<32x32xbf16>, vector<256x32xf32> -> vector<256x32xf32>
    %cst_3 = arith.constant 0.000000e+00 : f32
    %3 = vector.broadcast %cst_3 : f32 to vector<256x32xf32>
    %4 = arith.maximumf %2, %3 : vector<256x32xf32>
    %c0_4 = arith.constant 0 : index
    %c0_5 = arith.constant 0 : index
    %5 = vector.load %arg5[%c0_4, %c0_5] : memref<8x32xf32, #tpu.memory_space<vmem>>, vector<8x32xf32>
    %6 = arith.truncf %4 : vector<256x32xf32> to vector<256x32xbf16>
    %c0_6 = arith.constant 0 : index
    %c0_7 = arith.constant 0 : index
    %7 = vector.load %arg3[%c0_6, %c0_7] : memref<32x32xbf16, #tpu.memory_space<vmem>>, vector<32x32xbf16>
    %cst_8 = arith.constant dense<0.000000e+00> : vector<256x32xf32>
    %8 = tpu.matmul %6, %7, %cst_8 {dimension_numbers = #tpu.dot_dimension_numbers<[1], [0], [0], [1], [0, 0, 1, 1], [], []>} : vector<256x32xbf16>, vector<32x32xbf16>, vector<256x32xf32> -> vector<256x32xf32>
    %9 = vector.extract_strided_slice %5 {offsets = [0, 0], sizes = [1, 32], strides = [1, 1]} : vector<8x32xf32> to vector<1x32xf32>
    %10 = vector.broadcast %9 : vector<1x32xf32> to vector<256x32xf32>
    %11 = arith.addf %8, %10 : vector<256x32xf32>
    %cst_9 = arith.constant 0.000000e+00 : f32
    %12 = vector.broadcast %cst_9 : f32 to vector<256x32xf32>
    %13 = arith.maximumf %11, %12 : vector<256x32xf32>
    %14 = arith.truncf %13 : vector<256x32xf32> to vector<256x32xbf16>
    %c0_10 = arith.constant 0 : index
    %c0_11 = arith.constant 0 : index
    %15 = vector.load %arg4[%c0_10, %c0_11] : memref<32x16xbf16, #tpu.memory_space<vmem>>, vector<32x16xbf16>
    %cst_12 = arith.constant dense<0.000000e+00> : vector<256x16xf32>
    %16 = tpu.matmul %14, %15, %cst_12 {dimension_numbers = #tpu.dot_dimension_numbers<[1], [0], [0], [1], [0, 0, 1, 1], [], []>} : vector<256x32xbf16>, vector<32x16xbf16>, vector<256x16xf32> -> vector<256x16xf32>
    %17 = vector.extract_strided_slice %5 {offsets = [1, 0], sizes = [1, 16], strides = [1, 1]} : vector<8x32xf32> to vector<1x16xf32>
    %18 = vector.broadcast %17 : vector<1x16xf32> to vector<256x16xf32>
    %19 = arith.addf %16, %18 : vector<256x16xf32>
    %c0_13 = arith.constant 0 : index
    %c0_14 = arith.constant 0 : index
    %20 = vector.load %arg6[%c0_13, %c0_14] : memref<256x16xf32, #tpu.memory_space<vmem>>, vector<256x16xf32>
    tpu.vector_store %arg6[%c0_13, %c0_14], %19 {strides = array<i32>} : memref<256x16xf32, #tpu.memory_space<vmem>>, vector<256x16xf32>,
    return
  }
  func.func @transform_0(%arg0: i32) -> (i32, i32) {
    %c0_i32 = arith.constant 0 : i32
    %c0_i32_0 = arith.constant 0 : i32
    return %arg0, %c0_i32 : i32, i32
  }
  func.func @transform_1(%arg0: i32) -> (i32, i32) {
    %c0_i32 = arith.constant 0 : i32
    %c0_i32_0 = arith.constant 0 : i32
    %c0_i32_1 = arith.constant 0 : i32
    return %c0_i32, %c0_i32_0 : i32, i32
  }
  func.func @transform_2(%arg0: i32) -> (i32, i32) {
    %c0_i32 = arith.constant 0 : i32
    %c0_i32_0 = arith.constant 0 : i32
    %c0_i32_1 = arith.constant 0 : i32
    return %c0_i32, %c0_i32_0 : i32, i32
  }
  func.func @transform_3(%arg0: i32) -> (i32, i32) {
    %c0_i32 = arith.constant 0 : i32
    %c0_i32_0 = arith.constant 0 : i32
    %c0_i32_1 = arith.constant 0 : i32
    return %c0_i32, %c0_i32_0 : i32, i32
  }
  func.func @transform_4(%arg0: i32) -> (i32, i32) {
    %c0_i32 = arith.constant 0 : i32
    %c0_i32_0 = arith.constant 0 : i32
    %c0_i32_1 = arith.constant 0 : i32
    return %c0_i32, %c0_i32_0 : i32, i32
  }
  func.func @transform_5(%arg0: i32) -> (i32, i32) {
    %c0_i32 = arith.constant 0 : i32
    %c0_i32_0 = arith.constant 0 : i32
    return %arg0, %c0_i32 : i32, i32
  }
}

</mosaic_0001>

<llo_original>
// kernel: dtoid_network_forward.1
$region0: #{dtoid_network_forward.1}
  #allocation0 [shape = 'u32[]', space=smem, size = 0x4, offset = 0x4, fixed_abs, tag = 'smem constant byte address 0x4 - core index']
  #allocation1 [shape = 'u32[144,128]{1,0:T(1,128)}', space=vmem, size = 0x12000, scoped, tag = 'internal scratch']
  %s0 = inlined_call_operand.vmem [shape: bf16[256,32], index: 0, kind: input, shape index: {}]
  %s1 = inlined_call_operand.vmem [shape: bf16[32,32], index: 1, kind: input, shape index: {}]
  %s2 = inlined_call_operand.vmem [shape: bf16[32,32], index: 2, kind: input, shape index: {}]
  %s3 = inlined_call_operand.vmem [shape: bf16[32,16], index: 3, kind: input, shape index: {}]
  %s4 = inlined_call_operand.vmem [shape: f32[8,32], index: 4, kind: input, shape index: {}]
  %s5 = inlined_call_operand.vmem [shape: f32[256,16], index: 5, kind: output, shape index: {}]
  %s6 = sld [smem:[#allocation0]]
  $region30: #{dtoid_network_forward.1} parent=0
    _
  %s8 = ssub.s32 1, %s6
  %s9 = scalar_select 0, %s8, %s6
  // Predicated region
  $region2: #{dtoid_network_forward.1} parent=0 // pred_check
    _
  $region3: #{dtoid_network_forward.1} parent=0 // pred_check_branch
    %11 = sbr.rel (0) target = $region5
  $region4: #{dtoid_network_forward.1} parent=0 // pred_region
    _
  $region5: #{dtoid_network_forward.1} parent=0 // pred_fallthru
    _
  // Predicated region
  $region6: #{dtoid_network_forward.1} parent=0 // pred_check
    _
  $region7: #{dtoid_network_forward.1} parent=0 // pred_check_branch
    %13 = sbr.rel (0) target = $region9
  $region8: #{dtoid_network_forward.1} parent=0 // pred_region
    _
  $region9: #{dtoid_network_forward.1} parent=0 // pred_fallthru
    _
  // Predicated region
  $region10: #{dtoid_network_forward.1} parent=0 // pred_check
    _
  $region11: #{dtoid_network_forward.1} parent=0 // pred_check_branch
    %15 = sbr.rel (0) target = $region13
  $region12: #{dtoid_network_forward.1} parent=0 // pred_region
    _
  $region13: #{dtoid_network_forward.1} parent=0 // pred_fallthru
    _
  // Predicated region
  $region14: #{dtoid_network_forward.1} parent=0 // pred_check
    _
  $region15: #{dtoid_network_forward.1} parent=0 // pred_check_branch
    %17 = sbr.rel (0) target = $region17
  $region16: #{dtoid_network_forward.1} parent=0 // pred_region
    _
  $region17: #{dtoid_network_forward.1} parent=0 // pred_fallthru
    _
  // Predicated region
  $region18: #{dtoid_network_forward.1} parent=0 // pred_check
    _
  $region19: #{dtoid_network_forward.1} parent=0 // pred_check_branch
    %19 = sbr.rel (0) target = $region21
  $region20: #{dtoid_network_forward.1} parent=0 // pred_region
    _
  $region21: #{dtoid_network_forward.1} parent=0 // pred_fallthru
    _
  %v21 = vld [vmem:[%s0] sm:$0xf]
  %v22 = vld [vmem:[%s0 + $0x4] sm:$0xf]
  %v23 = vld [vmem:[%s0 + $0x8] sm:$0xf]
  %v24 = vld [vmem:[%s0 + $0xc] sm:$0xf]
  %v25 = vld [vmem:[%s0 + $0x10] sm:$0xf]
  %v26 = vld [vmem:[%s0 + $0x14] sm:$0xf]
  %v27 = vld [vmem:[%s0 + $0x18] sm:$0xf]
  %v28 = vld [vmem:[%s0 + $0x1c] sm:$0xf]
  %v29 = vld [vmem:[%s0 + $0x20] sm:$0xf]
  %v30 = vld [vmem:[%s0 + $0x24] sm:$0xf]
  %v31 = vld [vmem:[%s0 + $0x28] sm:$0xf]
  %v32 = vld [vmem:[%s0 + $0x2c] sm:$0xf]
  %v33 = vld [vmem:[%s0 + $0x30] sm:$0xf]
  %v34 = vld [vmem:[%s0 + $0x34] sm:$0xf]
  %v35 = vld [vmem:[%s0 + $0x38] sm:$0xf]
  %v36 = vld [vmem:[%s0 + $0x3c] sm:$0xf]
  %v37 = vld [vmem:[%s0 + $0x40] sm:$0xf]
  %v38 = vld [vmem:[%s0 + $0x44] sm:$0xf]
  %v39 = vld [vmem:[%s0 + $0x48] sm:$0xf]
  %v40 = vld [vmem:[%s0 + $0x4c] sm:$0xf]
  %v41 = vld [vmem:[%s0 + $0x50] sm:$0xf]
  %v42 = vld [vmem:[%s0 + $0x54] sm:$0xf]
  %v43 = vld [vmem:[%s0 + $0x58] sm:$0xf]
  %v44 = vld [vmem:[%s0 + $0x5c] sm:$0xf]
  %v45 = vld [vmem:[%s0 + $0x60] sm:$0xf]
  %v46 = vld [vmem:[%s0 + $0x64] sm:$0xf]
  %v47 = vld [vmem:[%s0 + $0x68] sm:$0xf]
  %v48 = vld [vmem:[%s0 + $0x6c] sm:$0xf]
  %v49 = vld [vmem:[%s0 + $0x70] sm:$0xf]
  %v50 = vld [vmem:[%s0 + $0x74] sm:$0xf]
  %v51 = vld [vmem:[%s0 + $0x78] sm:$0xf]
  %v52 = vld [vmem:[%s0 + $0x7c] sm:$0xf]
  %v53 = vld [vmem:[%s1] sm:$0xf]
  %v54 = vld [vmem:[%s1 + $0x4] sm:$0xf]
  %v55 = vld [vmem:[%s1 + $0x8] sm:$0xf]
  %v56 = vld [vmem:[%s1 + $0xc] sm:$0xf]
  %v89 = vunpack.c.l.b16 %v21
  %v90 = vunpack.c.l.b16 %v22
  %v91 = vunpack.c.l.b16 %v23
  %v92 = vunpack.c.l.b16 %v24
  %v93 = vunpack.c.l.b16 %v25
  %v94 = vunpack.c.l.b16 %v26
  %v95 = vunpack.c.l.b16 %v27
  %v96 = vunpack.c.l.b16 %v28
  %v97 = vunpack.c.l.b16 %v29
  %v98 = vunpack.c.l.b16 %v30
  %v99 = vunpack.c.l.b16 %v31
  %v100 = vunpack.c.l.b16 %v32
  %v101 = vunpack.c.l.b16 %v33
  %v102 = vunpack.c.l.b16 %v34
  %v103 = vunpack.c.l.b16 %v35
  %v104 = vunpack.c.l.b16 %v36
  %v105 = vunpack.c.l.b16 %v37
  %v106 = vunpack.c.l.b16 %v38
  %v107 = vunpack.c.l.b16 %v39
  %v108 = vunpack.c.l.b16 %v40
  %v109 = vunpack.c.l.b16 %v41
  %v110 = vunpack.c.l.b16 %v42
  %v111 = vunpack.c.l.b16 %v43
  %v112 = vunpack.c.l.b16 %v44
  %v113 = vunpack.c.l.b16 %v45
  %v114 = vunpack.c.l.b16 %v46
  %v115 = vunpack.c.l.b16 %v47
  %v116 = vunpack.c.l.b16 %v48
  %v117 = vunpack.c.l.b16 %v49
  %v118 = vunpack.c.l.b16 %v50
  %v119 = vunpack.c.l.b16 %v51
  %v120 = vunpack.c.l.b16 %v52
  %v121 = vpack.c.b16 %v90, %v89
  %v122 = vpack.c.b16 %v92, %v91
  %v123 = vpack.c.b16 %v94, %v93
  %v124 = vpack.c.b16 %v96, %v95
  %v125 = vpack.c.b16 %v98, %v97
  %v126 = vpack.c.b16 %v100, %v99
  %v127 = vpack.c.b16 %v102, %v101
  %v128 = vpack.c.b16 %v104, %v103
  %v129 = vpack.c.b16 %v106, %v105
  %v130 = vpack.c.b16 %v108, %v107
  %v131 = vpack.c.b16 %v110, %v109
  %v132 = vpack.c.b16 %v112, %v111
  %v133 = vpack.c.b16 %v114, %v113
  %v134 = vpack.c.b16 %v116, %v115
  %v135 = vpack.c.b16 %v118, %v117
  %v136 = vpack.c.b16 %v120, %v119
  %v141 = vunpack.c.l.b16 %v53
  %v142 = vunpack.c.l.b16 %v54
  %v143 = vunpack.c.l.b16 %v55
  %v144 = vunpack.c.l.b16 %v56
  %v145 = vpack.c.b16 %v142, %v141
  %v146 = vpack.c.b16 %v144, %v143
  %vm149 = vcmask 261120
  %v151 = vsel %vm149, %v121, 0
  %v154 = vsel %vm149, %v122, 0
  %v157 = vsel %vm149, %v123, 0
  %v160 = vsel %vm149, %v124, 0
  %v163 = vsel %vm149, %v125, 0
  %v166 = vsel %vm149, %v126, 0
  %v169 = vsel %vm149, %v127, 0
  %v172 = vsel %vm149, %v128, 0
  %v175 = vsel %vm149, %v129, 0
  %v178 = vsel %vm149, %v130, 0
  %v181 = vsel %vm149, %v131, 0
  %v184 = vsel %vm149, %v132, 0
  %v187 = vsel %vm149, %v133, 0
  %v190 = vsel %vm149, %v134, 0
  %v193 = vsel %vm149, %v135, 0
  %v196 = vsel %vm149, %v136, 0
  %198 = vmatprep.subr.bf16.mxu0 0
  %199 = vmatpush1.bf16.msra.mxu0 %v145
  %200 = vmatprep.subr.bf16.mxu0 0
  %201 = vmatpush1.bf16.msra.mxu0 %v146
  %202 = vmatprep.subr.bf16.mxu0 0
  %203 = vmatpush1.bf16.msra.mxu0 0
  %204 = vmatprep.subr.bf16.mxu0 0
  %205 = vmatpush1.bf16.msra.mxu0 0
  %206 = vmatprep.subr.bf16.mxu0 0
  %207 = vmatpush1.bf16.msra.mxu0 0
  %208 = vmatprep.subr.bf16.mxu0 0
  %209 = vmatpush1.bf16.msra.mxu0 0
  %210 = vmatprep.subr.bf16.mxu0 0
  %211 = vmatpush1.bf16.msra.mxu0 0
  %212 = vmatprep.subr.bf16.mxu0 0
  %213 = vmatpush1.bf16.msra.mxu0 0
  %214 = vmatprep.subr.bf16.mxu0 0
  %215 = vmatpush1.bf16.msra.mxu0 0
  %216 = vmatprep.subr.bf16.mxu0 0
  %217 = vmatpush1.bf16.msra.mxu0 0
  %218 = vmatprep.subr.bf16.mxu0 0
  %219 = vmatpush1.bf16.msra.mxu0 0
  %220 = vmatprep.subr.bf16.mxu0 0
  %221 = vmatpush1.bf16.msra.mxu0 0
  %222 = vmatprep.subr.bf16.mxu0 0
  %223 = vmatpush1.bf16.msra.mxu0 0
  %224 = vmatprep.subr.bf16.mxu0 0
  %225 = vmatpush1.bf16.msra.mxu0 0
  %226 = vmatprep.subr.bf16.mxu0 0
  %227 = vmatpush1.bf16.msra.mxu0 0
  %228 = vmatprep.subr.bf16.mxu0 0
  %229 = vmatpush1.bf16.msra.mxu0 0
  %230 = vmatprep.mubr.bf16.mxu0 0
  %231 = vmatmul.mubr.bf16.gmra.mrb[0].mxu0 %v151
  %v232 = vpop.f32.mrb[0].mxu0
  %v233 = vadd.f32 0.0, %v232
  %v234 = vpop.f32.mrb[0].mxu0
  %v235 = vpop.f32.mrb[0].mxu0
  %v236 = vadd.f32 0.0, %v235
  %v237 = vpop.f32.mrb[0].mxu0
  %238 = vmatprep.mubr.bf16.mxu0 0
  %239 = vmatmul.mubr.bf16.gmra.mrb[0].mxu0 %v154
  %v240 = vpop.f32.mrb[0].mxu0
  %v241 = vadd.f32 0.0, %v240
  %v242 = vpop.f32.mrb[0].mxu0
  %v243 = vpop.f32.mrb[0].mxu0
  %v244 = vadd.f32 0.0, %v243
  %v245 = vpop.f32.mrb[0].mxu0
  %246 = vmatprep.mubr.bf16.mxu0 0
  %247 = vmatmul.mubr.bf16.gmra.mrb[0].mxu0 %v157
  %v248 = vpop.f32.mrb[0].mxu0
  %v249 = vadd.f32 0.0, %v248
  %v250 = vpop.f32.mrb[0].mxu0
  %v251 = vpop.f32.mrb[0].mxu0
  %v252 = vadd.f32 0.0, %v251
  %v253 = vpop.f32.mrb[0].mxu0
  %254 = vmatprep.mubr.bf16.mxu0 0
  %255 = vmatmul.mubr.bf16.gmra.mrb[0].mxu0 %v160
  %v256 = vpop.f32.mrb[0].mxu0
  %v257 = vadd.f32 0.0, %v256
  %v258 = vpop.f32.mrb[0].mxu0
  %v259 = vpop.f32.mrb[0].mxu0
  %v260 = vadd.f32 0.0, %v259
  %v261 = vpop.f32.mrb[0].mxu0
  %262 = vmatprep.mubr.bf16.mxu0 0
  %263 = vmatmul.mubr.bf16.gmra.mrb[0].mxu0 %v163
  %v264 = vpop.f32.mrb[0].mxu0
  %v265 = vadd.f32 0.0, %v264
  %v266 = vpop.f32.mrb[0].mxu0
  %v267 = vpop.f32.mrb[0].mxu0
  %v268 = vadd.f32 0.0, %v267
  %v269 = vpop.f32.mrb[0].mxu0
  %270 = vmatprep.mubr.bf16.mxu0 0
  %271 = vmatmul.mubr.bf16.gmra.mrb[0].mxu0 %v166
  %v272 = vpop.f32.mrb[0].mxu0
  %v273 = vadd.f32 0.0, %v272
  %v274 = vpop.f32.mrb[0].mxu0
  %v275 = vpop.f32.mrb[0].mxu0
  %v276 = vadd.f32 0.0, %v275
  %v277 = vpop.f32.mrb[0].mxu0
  %278 = vmatprep.mubr.bf16.mxu0 0
  %279 = vmatmul.mubr.bf16.gmra.mrb[0].mxu0 %v169
  %v280 = vpop.f32.mrb[0].mxu0
  %v281 = vadd.f32 0.0, %v280
  %v282 = vpop.f32.mrb[0].mxu0
  %v283 = vpop.f32.mrb[0].mxu0
  %v284 = vadd.f32 0.0, %v283
  %v285 = vpop.f32.mrb[0].mxu0
  %286 = vmatprep.mubr.bf16.mxu0 0
  %287 = vmatmul.mubr.bf16.gmra.mrb[0].mxu0 %v172
  %v288 = vpop.f32.mrb[0].mxu0
  %v289 = vadd.f32 0.0, %v288
  %v290 = vpop.f32.mrb[0].mxu0
  %v291 = vpop.f32.mrb[0].mxu0
  %v292 = vadd.f32 0.0, %v291
  %v293 = vpop.f32.mrb[0].mxu0
  %294 = vmatprep.mubr.bf16.mxu0 0
  %295 = vmatmul.mubr.bf16.gmra.mrb[0].mxu0 %v175
  %v296 = vpop.f32.mrb[0].mxu0
  %v297 = vadd.f32 0.0, %v296
  %v298 = vpop.f32.mrb[0].mxu0
  %v299 = vpop.f32.mrb[0].mxu0
  %v300 = vadd.f32 0.0, %v299
  %v301 = vpop.f32.mrb[0].mxu0
  %302 = vmatprep.mubr.bf16.mxu0 0
  %303 = vmatmul.mubr.bf16.gmra.mrb[0].mxu0 %v178
  %v304 = vpop.f32.mrb[0].mxu0
  %v305 = vadd.f32 0.0, %v304
  %v306 = vpop.f32.mrb[0].mxu0
  %v307 = vpop.f32.mrb[0].mxu0
  %v308 = vadd.f32 0.0, %v307
  %v309 = vpop.f32.mrb[0].mxu0
  %310 = vmatprep.mubr.bf16.mxu0 0
  %311 = vmatmul.mubr.bf16.gmra.mrb[0].mxu0 %v181
  %v312 = vpop.f32.mrb[0].mxu0
  %v313 = vadd.f32 0.0, %v312
  %v314 = vpop.f32.mrb[0].mxu0
  %v315 = vpop.f32.mrb[0].mxu0
  %v316 = vadd.f32 0.0, %v315
  %v317 = vpop.f32.mrb[0].mxu0
  %318 = vmatprep.mubr.bf16.mxu0 0
  %319 = vmatmul.mubr.bf16.gmra.mrb[0].mxu0 %v184
  %v320 = vpop.f32.mrb[0].mxu0
  %v321 = vadd.f32 0.0, %v320
  %v322 = vpop.f32.mrb[0].mxu0
  %v323 = vpop.f32.mrb[0].mxu0
  %v324 = vadd.f32 0.0, %v323
  %v325 = vpop.f32.mrb[0].mxu0
  %326 = vmatprep.mubr.bf16.mxu0 0
  %327 = vmatmul.mubr.bf16.gmra.mrb[0].mxu0 %v187
  %v328 = vpop.f32.mrb[0].mxu0
  %v329 = vadd.f32 0.0, %v328
  %v330 = vpop.f32.mrb[0].mxu0
  %v331 = vpop.f32.mrb[0].mxu0
  %v332 = vadd.f32 0.0, %v331
  %v333 = vpop.f32.mrb[0].mxu0
  %334 = vmatprep.mubr.bf16.mxu0 0
  %335 = vmatmul.mubr.bf16.gmra.mrb[0].mxu0 %v190
  %v336 = vpop.f32.mrb[0].mxu0
  %v337 = vadd.f32 0.0, %v336
  %v338 = vpop.f32.mrb[0].mxu0
  %v339 = vpop.f32.mrb[0].mxu0
  %v340 = vadd.f32 0.0, %v339
  %v341 = vpop.f32.mrb[0].mxu0
  %342 = vmatprep.mubr.bf16.mxu0 0
  %343 = vmatmul.mubr.bf16.gmra.mrb[0].mxu0 %v193
  %v344 = vpop.f32.mrb[0].mxu0
  %v345 = vadd.f32 0.0, %v344
  %v346 = vpop.f32.mrb[0].mxu0
  %v347 = vpop.f32.mrb[0].mxu0
  %v348 = vadd.f32 0.0, %v347
  %v349 = vpop.f32.mrb[0].mxu0
  %350 = vmatprep.mubr.bf16.mxu0 0
  %351 = vmatmul.mubr.bf16.gmra.mrb[0].mxu0 %v196
  %v352 = vpop.f32.mrb[0].mxu0
  %v353 = vadd.f32 0.0, %v352
  %v354 = vpop.f32.mrb[0].mxu0
  %v355 = vpop.f32.mrb[0].mxu0
  %v356 = vadd.f32 0.0, %v355
  %v357 = vpop.f32.mrb[0].mxu0
  %358 = vdwg.mxu0
  %v359 = vmax.f32 %v233, 0.0
  %v360 = vmax.f32 %v236, 0.0
  %v361 = vmax.f32 %v241, 0.0
  %v362 = vmax.f32 %v244, 0.0
  %v363 = vmax.f32 %v249, 0.0
  %v364 = vmax.f32 %v252, 0.0
  %v365 = vmax.f32 %v257, 0.0
  %v366 = vmax.f32 %v260, 0.0
  %v367 = vmax.f32 %v265, 0.0
  %v368 = vmax.f32 %v268, 0.0
  %v369 = vmax.f32 %v273, 0.0
  %v370 = vmax.f32 %v276, 0.0
  %v371 = vmax.f32 %v281, 0.0
  %v372 = vmax.f32 %v284, 0.0
  %v373 = vmax.f32 %v289, 0.0
  %v374 = vmax.f32 %v292, 0.0
  %v375 = vmax.f32 %v297, 0.0
  %v376 = vmax.f32 %v300, 0.0
  %v377 = vmax.f32 %v305, 0.0
  %v378 = vmax.f32 %v308, 0.0
  %v379 = vmax.f32 %v313, 0.0
  %v380 = vmax.f32 %v316, 0.0
  %v381 = vmax.f32 %v321, 0.0
  %v382 = vmax.f32 %v324, 0.0
  %v383 = vmax.f32 %v329, 0.0
  %v384 = vmax.f32 %v332, 0.0
  %v385 = vmax.f32 %v337, 0.0
  %v386 = vmax.f32 %v340, 0.0
  %v387 = vmax.f32 %v345, 0.0
  %v388 = vmax.f32 %v348, 0.0
  %v389 = vmax.f32 %v353, 0.0
  %v390 = vmax.f32 %v356, 0.0
  %v391 = vld [vmem:[%s4] sm:$0xff]
  %v392 = vpack.c.bf16 %v360, %v359
  %v393 = vpack.c.bf16 %v362, %v361
  %v394 = vpack.c.bf16 %v364, %v363
  %v395 = vpack.c.bf16 %v366, %v365
  %v396 = vpack.c.bf16 %v368, %v367
  %v397 = vpack.c.bf16 %v370, %v369
  %v398 = vpack.c.bf16 %v372, %v371
  %v399 = vpack.c.bf16 %v374, %v373
  %v400 = vpack.c.bf16 %v376, %v375
  %v401 = vpack.c.bf16 %v378, %v377
  %v402 = vpack.c.bf16 %v380, %v379
  %v403 = vpack.c.bf16 %v382, %v381
  %v404 = vpack.c.bf16 %v384, %v383
  %v405 = vpack.c.bf16 %v386, %v385
  %v406 = vpack.c.bf16 %v388, %v387
  %v407 = vpack.c.bf16 %v390, %v389
  %v408 = vld [vmem:[%s2] sm:$0xf]
  %v409 = vld [vmem:[%s2 + $0x4] sm:$0xf]
  %v410 = vld [vmem:[%s2 + $0x8] sm:$0xf]
  %v411 = vld [vmem:[%s2 + $0xc] sm:$0xf]
  %v412 = vlaneseq
  %v413 = vshrl.u32 %v412, 7
  %v414 = vsub.s32 0, %v413
  %v415 = vrot.slane %v391, %v414
  %v420 = vunpack.c.l.b16 %v408
  %v421 = vunpack.c.l.b16 %v409
  %v422 = vunpack.c.l.b16 %v410
  %v423 = vunpack.c.l.b16 %v411
  %v424 = vpack.c.b16 %v421, %v420
  %v425 = vpack.c.b16 %v423, %v422
  %v429 = vsel %vm149, %v392, 0
  %v432 = vsel %vm149, %v393, 0
  %v435 = vsel %vm149, %v394, 0
  %v438 = vsel %vm149, %v395, 0
  %v441 = vsel %vm149, %v396, 0
  %v444 = vsel %vm149, %v397, 0
  %v447 = vsel %vm149, %v398, 0
  %v450 = vsel %vm149, %v399, 0
  %v453 = vsel %vm149, %v400, 0
  %v456 = vsel %vm149, %v401, 0
  %v459 = vsel %vm149, %v402, 0
  %v462 = vsel %vm149, %v403, 0
  %v465 = vsel %vm149, %v404, 0
  %v468 = vsel %vm149, %v405, 0
  %v471 = vsel %vm149, %v406, 0
  %v474 = vsel %vm149, %v407, 0
  %476 = vmatprep.subr.bf16.mxu0 0
  %477 = vmatpush1.bf16.msra.mxu0 %v424
  %478 = vmatprep.subr.bf16.mxu0 0
  %479 = vmatpush1.bf16.msra.mxu0 %v425
  %480 = vmatprep.subr.bf16.mxu0 0
  %481 = vmatpush1.bf16.msra.mxu0 0
  %482 = vmatprep.subr.bf16.mxu0 0
  %483 = vmatpush1.bf16.msra.mxu0 0
  %484 = vmatprep.subr.bf16.mxu0 0
  %485 = vmatpush1.bf16.msra.mxu0 0
  %486 = vmatprep.subr.bf16.mxu0 0
  %487 = vmatpush1.bf16.msra.mxu0 0
  %488 = vmatprep.subr.bf16.mxu0 0
  %489 = vmatpush1.bf16.msra.mxu0 0
  %490 = vmatprep.subr.bf16.mxu0 0
  %491 = vmatpush1.bf16.msra.mxu0 0
  %492 = vmatprep.subr.bf16.mxu0 0
  %493 = vmatpush1.bf16.msra.mxu0 0
  %494 = vmatprep.subr.bf16.mxu0 0
  %495 = vmatpush1.bf16.msra.mxu0 0
  %496 = vmatprep.subr.bf16.mxu0 0
  %497 = vmatpush1.bf16.msra.mxu0 0
  %498 = vmatprep.subr.bf16.mxu0 0
  %499 = vmatpush1.bf16.msra.mxu0 0
  %500 = vmatprep.subr.bf16.mxu0 0
  %501 = vmatpush1.bf16.msra.mxu0 0
  %502 = vmatprep.subr.bf16.mxu0 0
  %503 = vmatpush1.bf16.msra.mxu0 0
  %504 = vmatprep.subr.bf16.mxu0 0
  %505 = vmatpush1.bf16.msra.mxu0 0
  %506 = vmatprep.subr.bf16.mxu0 0
  %507 = vmatpush1.bf16.msra.mxu0 0
  %508 = vmatprep.mubr.bf16.mxu0 0
  %509 = vmatmul.mubr.bf16.gmra.mrb[0].mxu0 %v429
  %v510 = vpop.f32.mrb[0].mxu0
  %v511 = vadd.f32 %v415, %v510
  %v512 = vpop.f32.mrb[0].mxu0
  %v513 = vpop.f32.mrb[0].mxu0
  %v514 = vadd.f32 %v415, %v513
  %v515 = vpop.f32.mrb[0].mxu0
  %516 = vmatprep.mubr.bf16.mxu0 0
  %517 = vmatmul.mubr.bf16.gmra.mrb[0].mxu0 %v432
  %v518 = vpop.f32.mrb[0].mxu0
  %v519 = vadd.f32 %v415, %v518
  %v520 = vpop.f32.mrb[0].mxu0
  %v521 = vpop.f32.mrb[0].mxu0
  %v522 = vadd.f32 %v415, %v521
  %v523 = vpop.f32.mrb[0].mxu0
  %524 = vmatprep.mubr.bf16.mxu0 0
  %525 = vmatmul.mubr.bf16.gmra.mrb[0].mxu0 %v435
  %v526 = vpop.f32.mrb[0].mxu0
  %v527 = vadd.f32 %v415, %v526
  %v528 = vpop.f32.mrb[0].mxu0
  %v529 = vpop.f32.mrb[0].mxu0
  %v530 = vadd.f32 %v415, %v529
  %v531 = vpop.f32.mrb[0].mxu0
  %532 = vmatprep.mubr.bf16.mxu0 0
  %533 = vmatmul.mubr.bf16.gmra.mrb[0].mxu0 %v438
  %v534 = vpop.f32.mrb[0].mxu0
  %v535 = vadd.f32 %v415, %v534
  %v536 = vpop.f32.mrb[0].mxu0
  %v537 = vpop.f32.mrb[0].mxu0
  %v538 = vadd.f32 %v415, %v537
  %v539 = vpop.f32.mrb[0].mxu0
  %540 = vmatprep.mubr.bf16.mxu0 0
  %541 = vmatmul.mubr.bf16.gmra.mrb[0].mxu0 %v441
  %v542 = vpop.f32.mrb[0].mxu0
  %v543 = vadd.f32 %v415, %v542
  %v544 = vpop.f32.mrb[0].mxu0
  %v545 = vpop.f32.mrb[0].mxu0
  %v546 = vadd.f32 %v415, %v545
  %v547 = vpop.f32.mrb[0].mxu0
  %548 = vmatprep.mubr.bf16.mxu0 0
  %549 = vmatmul.mubr.bf16.gmra.mrb[0].mxu0 %v444
  %v550 = vpop.f32.mrb[0].mxu0
  %v551 = vadd.f32 %v415, %v550
  %v552 = vpop.f32.mrb[0].mxu0
  %v553 = vpop.f32.mrb[0].mxu0
  %v554 = vadd.f32 %v415, %v553
  %v555 = vpop.f32.mrb[0].mxu0
  %556 = vmatprep.mubr.bf16.mxu0 0
  %557 = vmatmul.mubr.bf16.gmra.mrb[0].mxu0 %v447
  %v558 = vpop.f32.mrb[0].mxu0
  %v559 = vadd.f32 %v415, %v558
  %v560 = vpop.f32.mrb[0].mxu0
  %v561 = vpop.f32.mrb[0].mxu0
  %v562 = vadd.f32 %v415, %v561
  %v563 = vpop.f32.mrb[0].mxu0
  %564 = vmatprep.mubr.bf16.mxu0 0
  %565 = vmatmul.mubr.bf16.gmra.mrb[0].mxu0 %v450
  %v566 = vpop.f32.mrb[0].mxu0
  %v567 = vadd.f32 %v415, %v566
  %v568 = vpop.f32.mrb[0].mxu0
  %v569 = vpop.f32.mrb[0].mxu0
  %v570 = vadd.f32 %v415, %v569
  %v571 = vpop.f32.mrb[0].mxu0
  %572 = vmatprep.mubr.bf16.mxu0 0
  %573 = vmatmul.mubr.bf16.gmra.mrb[0].mxu0 %v453
  %v574 = vpop.f32.mrb[0].mxu0
  %v575 = vadd.f32 %v415, %v574
  %v576 = vpop.f32.mrb[0].mxu0
  %v577 = vpop.f32.mrb[0].mxu0
  %v578 = vadd.f32 %v415, %v577
  %v579 = vpop.f32.mrb[0].mxu0
  %580 = vmatprep.mubr.bf16.mxu0 0
  %581 = vmatmul.mubr.bf16.gmra.mrb[0].mxu0 %v456
  %v582 = vpop.f32.mrb[0].mxu0
  %v583 = vadd.f32 %v415, %v582
  %v584 = vpop.f32.mrb[0].mxu0
  %v585 = vpop.f32.mrb[0].mxu0
  %v586 = vadd.f32 %v415, %v585
  %v587 = vpop.f32.mrb[0].mxu0
  %588 = vmatprep.mubr.bf16.mxu0 0
  %589 = vmatmul.mubr.bf16.gmra.mrb[0].mxu0 %v459
  %v590 = vpop.f32.mrb[0].mxu0
  %v591 = vadd.f32 %v415, %v590
  %v592 = vpop.f32.mrb[0].mxu0
  %v593 = vpop.f32.mrb[0].mxu0
  %v594 = vadd.f32 %v415, %v593
  %v595 = vpop.f32.mrb[0].mxu0
  %596 = vmatprep.mubr.bf16.mxu0 0
  %597 = vmatmul.mubr.bf16.gmra.mrb[0].mxu0 %v462
  %v598 = vpop.f32.mrb[0].mxu0
  %v599 = vadd.f32 %v415, %v598
  %v600 = vpop.f32.mrb[0].mxu0
  %v601 = vpop.f32.mrb[0].mxu0
  %v602 = vadd.f32 %v415, %v601
  %v603 = vpop.f32.mrb[0].mxu0
  %604 = vmatprep.mubr.bf16.mxu0 0
  %605 = vmatmul.mubr.bf16.gmra.mrb[0].mxu0 %v465
  %v606 = vpop.f32.mrb[0].mxu0
  %v607 = vadd.f32 %v415, %v606
  %v608 = vpop.f32.mrb[0].mxu0
  %v609 = vpop.f32.mrb[0].mxu0
  %v610 = vadd.f32 %v415, %v609
  %v611 = vpop.f32.mrb[0].mxu0
  %612 = vmatprep.mubr.bf16.mxu0 0
  %613 = vmatmul.mubr.bf16.gmra.mrb[0].mxu0 %v468
  %v614 = vpop.f32.mrb[0].mxu0
  %v615 = vadd.f32 %v415, %v614
  %v616 = vpop.f32.mrb[0].mxu0
  %v617 = vpop.f32.mrb[0].mxu0
  %v618 = vadd.f32 %v415, %v617
  %v619 = vpop.f32.mrb[0].mxu0
  %620 = vmatprep.mubr.bf16.mxu0 0
  %621 = vmatmul.mubr.bf16.gmra.mrb[0].mxu0 %v471
  %v622 = vpop.f32.mrb[0].mxu0
  %v623 = vadd.f32 %v415, %v622
  %v624 = vpop.f32.mrb[0].mxu0
  %v625 = vpop.f32.mrb[0].mxu0
  %v626 = vadd.f32 %v415, %v625
  %v627 = vpop.f32.mrb[0].mxu0
  %628 = vmatprep.mubr.bf16.mxu0 0
  %629 = vmatmul.mubr.bf16.gmra.mrb[0].mxu0 %v474
  %v630 = vpop.f32.mrb[0].mxu0
  %v631 = vadd.f32 %v415, %v630
  %v632 = vpop.f32.mrb[0].mxu0
  %v633 = vpop.f32.mrb[0].mxu0
  %v634 = vadd.f32 %v415, %v633
  %v635 = vpop.f32.mrb[0].mxu0
  %636 = vdwg.mxu0
  %v637 = vmax.f32 %v511, 0.0
  %v638 = vmax.f32 %v514, 0.0
  %v639 = vmax.f32 %v519, 0.0
  %v640 = vmax.f32 %v522, 0.0
  %v641 = vmax.f32 %v527, 0.0
  %v642 = vmax.f32 %v530, 0.0
  %v643 = vmax.f32 %v535, 0.0
  %v644 = vmax.f32 %v538, 0.0
  %v645 = vmax.f32 %v543, 0.0
  %v646 = vmax.f32 %v546, 0.0
  %v647 = vmax.f32 %v551, 0.0
  %v648 = vmax.f32 %v554, 0.0
  %v649 = vmax.f32 %v559, 0.0
  %v650 = vmax.f32 %v562, 0.0
  %v651 = vmax.f32 %v567, 0.0
  %v652 = vmax.f32 %v570, 0.0
  %v653 = vmax.f32 %v575, 0.0
  %v654 = vmax.f32 %v578, 0.0
  %v655 = vmax.f32 %v583, 0.0
  %v656 = vmax.f32 %v586, 0.0
  %v657 = vmax.f32 %v591, 0.0
  %v658 = vmax.f32 %v594, 0.0
  %v659 = vmax.f32 %v599, 0.0
  %v660 = vmax.f32 %v602, 0.0
  %v661 = vmax.f32 %v607, 0.0
  %v662 = vmax.f32 %v610, 0.0
  %v663 = vmax.f32 %v615, 0.0
  %v664 = vmax.f32 %v618, 0.0
  %v665 = vmax.f32 %v623, 0.0
  %v666 = vmax.f32 %v626, 0.0
  %v667 = vmax.f32 %v631, 0.0
  %v668 = vmax.f32 %v634, 0.0
  %v669 = vpack.c.bf16 %v638, %v637
  %v670 = vpack.c.bf16 %v640, %v639
  %v671 = vpack.c.bf16 %v642, %v641
  %v672 = vpack.c.bf16 %v644, %v643
  %v673 = vpack.c.bf16 %v646, %v645
  %v674 = vpack.c.bf16 %v648, %v647
  %v675 = vpack.c.bf16 %v650, %v649
  %v676 = vpack.c.bf16 %v652, %v651
  %v677 = vpack.c.bf16 %v654, %v653
  %v678 = vpack.c.bf16 %v656, %v655
  %v679 = vpack.c.bf16 %v658, %v657
  %v680 = vpack.c.bf16 %v660, %v659
  %v681 = vpack.c.bf16 %v662, %v661
  %v682 = vpack.c.bf16 %v664, %v663
  %v683 = vpack.c.bf16 %v666, %v665
  %v684 = vpack.c.bf16 %v668, %v667
  %v685 = vld [vmem:[%s3] sm:$0xf]
  %v686 = vld [vmem:[%s3 + $0x4] sm:$0xf]
  %v687 = vld [vmem:[%s3 + $0x8] sm:$0xf]
  %v688 = vld [vmem:[%s3 + $0xc] sm:$0xf]
  %v689 = vlaneseq
  %v690 = vshrl.u32 %v689, 7
  %v691 = vsub.s32 1, %v690
  %v692 = vrot.slane %v391, %v691
  %v697 = vunpack.c.l.b16 %v685
  %v698 = vunpack.c.l.b16 %v686
  %v699 = vunpack.c.l.b16 %v687
  %v700 = vunpack.c.l.b16 %v688
  %v701 = vpack.c.b16 %v698, %v697
  %v702 = vpack.c.b16 %v700, %v699
  %v706 = vsel %vm149, %v669, 0
  %v709 = vsel %vm149, %v670, 0
  %v712 = vsel %vm149, %v671, 0
  %v715 = vsel %vm149, %v672, 0
  %v718 = vsel %vm149, %v673, 0
  %v721 = vsel %vm149, %v674, 0
  %v724 = vsel %vm149, %v675, 0
  %v727 = vsel %vm149, %v676, 0
  %v730 = vsel %vm149, %v677, 0
  %v733 = vsel %vm149, %v678, 0
  %v736 = vsel %vm149, %v679, 0
  %v739 = vsel %vm149, %v680, 0
  %v742 = vsel %vm149, %v681, 0
  %v745 = vsel %vm149, %v682, 0
  %v748 = vsel %vm149, %v683, 0
  %v751 = vsel %vm149, %v684, 0
  %753 = vmatprep.subr.bf16.mxu0 0
  %754 = vmatpush1.bf16.msra.mxu0 %v701
  %755 = vmatprep.subr.bf16.mxu0 0
  %756 = vmatpush1.bf16.msra.mxu0 %v702
  %757 = vmatprep.subr.bf16.mxu0 0
  %758 = vmatpush1.bf16.msra.mxu0 0
  %759 = vmatprep.subr.bf16.mxu0 0
  %760 = vmatpush1.bf16.msra.mxu0 0
  %761 = vmatprep.subr.bf16.mxu0 0
  %762 = vmatpush1.bf16.msra.mxu0 0
  %763 = vmatprep.subr.bf16.mxu0 0
  %764 = vmatpush1.bf16.msra.mxu0 0
  %765 = vmatprep.subr.bf16.mxu0 0
  %766 = vmatpush1.bf16.msra.mxu0 0
  %767 = vmatprep.subr.bf16.mxu0 0
  %768 = vmatpush1.bf16.msra.mxu0 0
  %769 = vmatprep.subr.bf16.mxu0 0
  %770 = vmatpush1.bf16.msra.mxu0 0
  %771 = vmatprep.subr.bf16.mxu0 0
  %772 = vmatpush1.bf16.msra.mxu0 0
  %773 = vmatprep.subr.bf16.mxu0 0
  %774 = vmatpush1.bf16.msra.mxu0 0
  %775 = vmatprep.subr.bf16.mxu0 0
  %776 = vmatpush1.bf16.msra.mxu0 0
  %777 = vmatprep.subr.bf16.mxu0 0
  %778 = vmatpush1.bf16.msra.mxu0 0
  %779 = vmatprep.subr.bf16.mxu0 0
  %780 = vmatpush1.bf16.msra.mxu0 0
  %781 = vmatprep.subr.bf16.mxu0 0
  %782 = vmatpush1.bf16.msra.mxu0 0
  %783 = vmatprep.subr.bf16.mxu0 0
  %784 = vmatpush1.bf16.msra.mxu0 0
  %785 = vmatprep.mubr.bf16.mxu0 0
  %786 = vmatmul.mubr.bf16.gmra.mrb[0].mxu0 %v706
  %v787 = vpop.f32.mrb[0].mxu0
  %v788 = vadd.f32 %v692, %v787
  %v789 = vpop.f32.mrb[0].mxu0
  %v790 = vpop.f32.mrb[0].mxu0
  %v791 = vadd.f32 %v692, %v790
  %v792 = vpop.f32.mrb[0].mxu0
  %793 = vmatprep.mubr.bf16.mxu0 0
  %794 = vmatmul.mubr.bf16.gmra.mrb[0].mxu0 %v709
  %v795 = vpop.f32.mrb[0].mxu0
  %v796 = vadd.f32 %v692, %v795
  %v797 = vpop.f32.mrb[0].mxu0
  %v798 = vpop.f32.mrb[0].mxu0
  %v799 = vadd.f32 %v692, %v798
  %v800 = vpop.f32.mrb[0].mxu0
  %801 = vmatprep.mubr.bf16.mxu0 0
  %802 = vmatmul.mubr.bf16.gmra.mrb[0].mxu0 %v712
  %v803 = vpop.f32.mrb[0].mxu0
  %v804 = vadd.f32 %v692, %v803
  %v805 = vpop.f32.mrb[0].mxu0
  %v806 = vpop.f32.mrb[0].mxu0
  %v807 = vadd.f32 %v692, %v806
  %v808 = vpop.f32.mrb[0].mxu0
  %809 = vmatprep.mubr.bf16.mxu0 0
  %810 = vmatmul.mubr.bf16.gmra.mrb[0].mxu0 %v715
  %v811 = vpop.f32.mrb[0].mxu0
  %v812 = vadd.f32 %v692, %v811
  %v813 = vpop.f32.mrb[0].mxu0
  %v814 = vpop.f32.mrb[0].mxu0
  %v815 = vadd.f32 %v692, %v814
  %v816 = vpop.f32.mrb[0].mxu0
  %817 = vmatprep.mubr.bf16.mxu0 0
  %818 = vmatmul.mubr.bf16.gmra.mrb[0].mxu0 %v718
  %v819 = vpop.f32.mrb[0].mxu0
  %v820 = vadd.f32 %v692, %v819
  %v821 = vpop.f32.mrb[0].mxu0
  %v822 = vpop.f32.mrb[0].mxu0
  %v823 = vadd.f32 %v692, %v822
  %v824 = vpop.f32.mrb[0].mxu0
  %825 = vmatprep.mubr.bf16.mxu0 0
  %826 = vmatmul.mubr.bf16.gmra.mrb[0].mxu0 %v721
  %v827 = vpop.f32.mrb[0].mxu0
  %v828 = vadd.f32 %v692, %v827
  %v829 = vpop.f32.mrb[0].mxu0
  %v830 = vpop.f32.mrb[0].mxu0
  %v831 = vadd.f32 %v692, %v830
  %v832 = vpop.f32.mrb[0].mxu0
  %833 = vmatprep.mubr.bf16.mxu0 0
  %834 = vmatmul.mubr.bf16.gmra.mrb[0].mxu0 %v724
  %v835 = vpop.f32.mrb[0].mxu0
  %v836 = vadd.f32 %v692, %v835
  %v837 = vpop.f32.mrb[0].mxu0
  %v838 = vpop.f32.mrb[0].mxu0
  %v839 = vadd.f32 %v692, %v838
  %v840 = vpop.f32.mrb[0].mxu0
  %841 = vmatprep.mubr.bf16.mxu0 0
  %842 = vmatmul.mubr.bf16.gmra.mrb[0].mxu0 %v727
  %v843 = vpop.f32.mrb[0].mxu0
  %v844 = vadd.f32 %v692, %v843
  %v845 = vpop.f32.mrb[0].mxu0
  %v846 = vpop.f32.mrb[0].mxu0
  %v847 = vadd.f32 %v692, %v846
  %v848 = vpop.f32.mrb[0].mxu0
  %849 = vmatprep.mubr.bf16.mxu0 0
  %850 = vmatmul.mubr.bf16.gmra.mrb[0].mxu0 %v730
  %v851 = vpop.f32.mrb[0].mxu0
  %v852 = vadd.f32 %v692, %v851
  %v853 = vpop.f32.mrb[0].mxu0
  %v854 = vpop.f32.mrb[0].mxu0
  %v855 = vadd.f32 %v692, %v854
  %v856 = vpop.f32.mrb[0].mxu0
  %857 = vmatprep.mubr.bf16.mxu0 0
  %858 = vmatmul.mubr.bf16.gmra.mrb[0].mxu0 %v733
  %v859 = vpop.f32.mrb[0].mxu0
  %v860 = vadd.f32 %v692, %v859
  %v861 = vpop.f32.mrb[0].mxu0
  %v862 = vpop.f32.mrb[0].mxu0
  %v863 = vadd.f32 %v692, %v862
  %v864 = vpop.f32.mrb[0].mxu0
  %865 = vmatprep.mubr.bf16.mxu0 0
  %866 = vmatmul.mubr.bf16.gmra.mrb[0].mxu0 %v736
  %v867 = vpop.f32.mrb[0].mxu0
  %v868 = vadd.f32 %v692, %v867
  %v869 = vpop.f32.mrb[0].mxu0
  %v870 = vpop.f32.mrb[0].mxu0
  %v871 = vadd.f32 %v692, %v870
  %v872 = vpop.f32.mrb[0].mxu0
  %873 = vmatprep.mubr.bf16.mxu0 0
  %874 = vmatmul.mubr.bf16.gmra.mrb[0].mxu0 %v739
  %v875 = vpop.f32.mrb[0].mxu0
  %v876 = vadd.f32 %v692, %v875
  %v877 = vpop.f32.mrb[0].mxu0
  %v878 = vpop.f32.mrb[0].mxu0
  %v879 = vadd.f32 %v692, %v878
  %v880 = vpop.f32.mrb[0].mxu0
  %881 = vmatprep.mubr.bf16.mxu0 0
  %882 = vmatmul.mubr.bf16.gmra.mrb[0].mxu0 %v742
  %v883 = vpop.f32.mrb[0].mxu0
  %v884 = vadd.f32 %v692, %v883
  %v885 = vpop.f32.mrb[0].mxu0
  %v886 = vpop.f32.mrb[0].mxu0
  %v887 = vadd.f32 %v692, %v886
  %v888 = vpop.f32.mrb[0].mxu0
  %889 = vmatprep.mubr.bf16.mxu0 0
  %890 = vmatmul.mubr.bf16.gmra.mrb[0].mxu0 %v745
  %v891 = vpop.f32.mrb[0].mxu0
  %v892 = vadd.f32 %v692, %v891
  %v893 = vpop.f32.mrb[0].mxu0
  %v894 = vpop.f32.mrb[0].mxu0
  %v895 = vadd.f32 %v692, %v894
  %v896 = vpop.f32.mrb[0].mxu0
  %897 = vmatprep.mubr.bf16.mxu0 0
  %898 = vmatmul.mubr.bf16.gmra.mrb[0].mxu0 %v748
  %v899 = vpop.f32.mrb[0].mxu0
  %v900 = vadd.f32 %v692, %v899
  %v901 = vpop.f32.mrb[0].mxu0
  %v902 = vpop.f32.mrb[0].mxu0
  %v903 = vadd.f32 %v692, %v902
  %v904 = vpop.f32.mrb[0].mxu0
  %905 = vmatprep.mubr.bf16.mxu0 0
  %906 = vmatmul.mubr.bf16.gmra.mrb[0].mxu0 %v751
  %v907 = vpop.f32.mrb[0].mxu0
  %v908 = vadd.f32 %v692, %v907
  %v909 = vpop.f32.mrb[0].mxu0
  %v910 = vpop.f32.mrb[0].mxu0
  %v911 = vadd.f32 %v692, %v910
  %v912 = vpop.f32.mrb[0].mxu0
  %913 = vdwg.mxu0
  %vm914 = vcmask 130048
  %915 = vst.msk [vmem:[%s5] sm:$0xff] %vm914, %v788
  %916 = vst.msk [vmem:[%s5 + $0x8] sm:$0xff] %vm914, %v791
  %917 = vst.msk [vmem:[%s5 + $0x10] sm:$0xff] %vm914, %v796
  %918 = vst.msk [vmem:[%s5 + $0x18] sm:$0xff] %vm914, %v799
  %919 = vst.msk [vmem:[%s5 + $0x20] sm:$0xff] %vm914, %v804
  %920 = vst.msk [vmem:[%s5 + $0x28] sm:$0xff] %vm914, %v807
  %921 = vst.msk [vmem:[%s5 + $0x30] sm:$0xff] %vm914, %v812
  %922 = vst.msk [vmem:[%s5 + $0x38] sm:$0xff] %vm914, %v815
  %923 = vst.msk [vmem:[%s5 + $0x40] sm:$0xff] %vm914, %v820
  %924 = vst.msk [vmem:[%s5 + $0x48] sm:$0xff] %vm914, %v823
  %925 = vst.msk [vmem:[%s5 + $0x50] sm:$0xff] %vm914, %v828
  %926 = vst.msk [vmem:[%s5 + $0x58] sm:$0xff] %vm914, %v831
  %927 = vst.msk [vmem:[%s5 + $0x60] sm:$0xff] %vm914, %v836
  %928 = vst.msk [vmem:[%s5 + $0x68] sm:$0xff] %vm914, %v839
  %929 = vst.msk [vmem:[%s5 + $0x70] sm:$0xff] %vm914, %v844
  %930 = vst.msk [vmem:[%s5 + $0x78] sm:$0xff] %vm914, %v847
  %931 = vst.msk [vmem:[%s5 + $0x80] sm:$0xff] %vm914, %v852
  %932 = vst.msk [vmem:[%s5 + $0x88] sm:$0xff] %vm914, %v855
  %933 = vst.msk [vmem:[%s5 + $0x90] sm:$0xff] %vm914, %v860
  %934 = vst.msk [vmem:[%s5 + $0x98] sm:$0xff] %vm914, %v863
  %935 = vst.msk [vmem:[%s5 + $0xa0] sm:$0xff] %vm914, %v868
  %936 = vst.msk [vmem:[%s5 + $0xa8] sm:$0xff] %vm914, %v871
  %937 = vst.msk [vmem:[%s5 + $0xb0] sm:$0xff] %vm914, %v876
  %938 = vst.msk [vmem:[%s5 + $0xb8] sm:$0xff] %vm914, %v879
  %939 = vst.msk [vmem:[%s5 + $0xc0] sm:$0xff] %vm914, %v884
  %940 = vst.msk [vmem:[%s5 + $0xc8] sm:$0xff] %vm914, %v887
  %941 = vst.msk [vmem:[%s5 + $0xd0] sm:$0xff] %vm914, %v892
  %942 = vst.msk [vmem:[%s5 + $0xd8] sm:$0xff] %vm914, %v895
  %943 = vst.msk [vmem:[%s5 + $0xe0] sm:$0xff] %vm914, %v900
  %944 = vst.msk [vmem:[%s5 + $0xe8] sm:$0xff] %vm914, %v903
  %945 = vst.msk [vmem:[%s5 + $0xf0] sm:$0xff] %vm914, %v908
  %946 = vst.msk [vmem:[%s5 + $0xf8] sm:$0xff] %vm914, %v911
  // Predicated region
  $region22: #{dtoid_network_forward.1} parent=0 // pred_check
    _
  $region23: #{dtoid_network_forward.1} parent=0 // pred_check_branch
    %948 = sbr.rel (0) target = $region25
  $region24: #{dtoid_network_forward.1} parent=0 // pred_region
    _
  $region25: #{dtoid_network_forward.1} parent=0 // pred_fallthru
    _
  // Predicated region
  $region26: #{dtoid_network_forward.1} parent=0 // pred_check
    _
  $region27: #{dtoid_network_forward.1} parent=0 // pred_check_branch
    %950 = sbr.rel (0) target = $region29
  $region28: #{dtoid_network_forward.1} parent=0 // pred_region
    _
  $region29: #{dtoid_network_forward.1} parent=0 // pred_fallthru
    _

</llo_original>
